<compile_context>
chip_gen: v7x
topology: tpu7x:2x2x1
jax: 0.10.0
libtpu: 0.0.40
codegen_flags: <defaults>
</compile_context>

<pallas_src>
import jax
import jax.numpy as jnp
from jax.experimental import pallas as pl
from jax.experimental.pallas import tpu as pltpu

EPS = 1e-6


def conv2d_block_kernel(x_ref, w_ref, b_ref, g_ref, gmat_ref, scale_ref, shift_ref, o_ref):
    # x_ref:     (1, H + 2p, W*Cin)   H-padded, W-folded input for one batch element
    # w_ref:     (KH, W*Cin, W*Cout)  banded conv weights (kw taps + W zero-pad folded in)
    # b_ref:     (1, W*Cout)          conv bias, tiled along W
    # g_ref:     (1, W*Cout)          RMSNorm gamma, tiled along W
    # gmat_ref:  (W*Cout, W*Cout)     block-diagonal mean-over-channel matrix
    # scale_ref: (1, 1, W*Cout)       per-(batch, channel) FiLM scale, tiled along W
    # shift_ref: (1, 1, W*Cout)       per-(batch, channel) FiLM shift, tiled along W
    # o_ref:     (1, TH, W*Cout)      one row-block of the output
    KH = w_ref.shape[0]
    TH, N = o_ref.shape[1], o_ref.shape[2]

    # First output row of this row-block (aligned to TH).
    r0 = pl.multiple_of(pl.program_id(1) * TH, TH)

    # --- 3x3 conv: KH lane-dense matmuls on the MXU, accumulated in f32 ---
    acc = jnp.zeros((TH, N), jnp.float32)
    for kh in range(KH):
        rows = x_ref[0, pl.ds(r0 + kh, TH), :]        # (TH, W*Cin), pure sublane slice
        acc = acc + jnp.dot(rows, w_ref[kh], preferred_element_type=jnp.float32)
    acc = acc + b_ref[...]                            # (1, W*Cout) broadcast over rows

    # --- RMSNorm over channels: per-(h, w) mean of squares, broadcast across the Cout lanes of
    #     each w-group, computed as one matmul with a block-diagonal averaging matrix ---
    ms = jnp.dot(acc * acc, gmat_ref[...], preferred_element_type=jnp.float32)
    y = acc * jax.lax.rsqrt(ms + EPS) * g_ref[...]

    # --- optional FiLM scale/shift: x * (scale + 1) + shift ---
    y = y * (scale_ref[0] + 1.0) + shift_ref[0]

    # --- SiLU activation ---
    y = y * jax.nn.sigmoid(y)

    # Dropout: identity in eval mode / p=0.0 (nothing to do)
    o_ref[...] = y.reshape(1, TH, N).astype(o_ref.dtype)


def conv2d_block(x_nhwc, w_hwio, bias, gamma, scale=None, shift=None, padding=1, block_h=8):
    B, H, W, Cin = x_nhwc.shape
    KH, KW, _, Cout = w_hwio.shape
    assert 2 * padding == KH - 1 == KW - 1, "'same' conv assumed (kernel_size=3, padding=1)"

    WCin, WCout = W * Cin, W * Cout
    TH = block_h if H % block_h == 0 else H
    Hp = H + 2 * padding

    # W-folded, lane-dense activation layout; pad only along H (1-row halo each side).
    x3 = x_nhwc.reshape(B, H, WCin)
    xh = jnp.pad(x3, ((0, 0), (padding, padding), (0, 0)))

    # Banded (block-Toeplitz) conv weights:
    #   wk[kh, wi*Cin+ci, wo*Cout+co] = w[kh, wi-wo+padding, ci, co] if 0 <= wi-wo+padding < KW else 0
    # (folds the kw taps AND the conv's W zero-padding into the weight).
    wi = jnp.arange(W)[:, None, None]
    wo = jnp.arange(W)[None, :, None]
    kw = jnp.arange(KW)[None, None, :]
    band = (wi - wo + padding == kw).astype(w_hwio.dtype)              # (W, W, KW)
    wk = jnp.einsum('abk,hkio->haibo', band, w_hwio)                   # (KH, W, Cin, W, Cout)
    wk = wk.reshape(KH, WCin, WCout)

    # Block-diagonal averaging matrix for the channel mean (divides by the TRUE Cout).
    gmat = jnp.kron(jnp.eye(W, dtype=jnp.float32),
                    jnp.full((Cout, Cout), 1.0 / Cout, jnp.float32))   # (WCout, WCout)

    if scale is None:
        scale = jnp.zeros((B, Cout), x_nhwc.dtype)
    if shift is None:
        shift = jnp.zeros((B, Cout), x_nhwc.dtype)

    # Per-channel params tiled along W so they broadcast lane-aligned in the folded layout.
    bias_l = jnp.tile(bias, W).reshape(1, WCout)
    gamma_l = jnp.tile(gamma, W).reshape(1, WCout)
    scale_l = jnp.tile(scale, (1, W)).reshape(B, 1, WCout)
    shift_l = jnp.tile(shift, (1, W)).reshape(B, 1, WCout)

    out = pl.pallas_call(
        conv2d_block_kernel,
        out_shape=jax.ShapeDtypeStruct((B, H, WCout), x_nhwc.dtype),
        grid_spec=pltpu.PrefetchScalarGridSpec(
            num_scalar_prefetch=0,
            grid=(B, H // TH),
            in_specs=[
                # Same block index across r -> DMA'd once per batch, revisited by row blocks.
                pl.BlockSpec((1, Hp, WCin), lambda b, r: (b, 0, 0)),
                pl.BlockSpec((KH, WCin, WCout), lambda b, r: (0, 0, 0)),
                pl.BlockSpec((1, WCout), lambda b, r: (0, 0)),
                pl.BlockSpec((1, WCout), lambda b, r: (0, 0)),
                pl.BlockSpec((WCout, WCout), lambda b, r: (0, 0)),
                pl.BlockSpec((1, 1, WCout), lambda b, r: (b, 0, 0)),
                pl.BlockSpec((1, 1, WCout), lambda b, r: (b, 0, 0)),
            ],
            out_specs=pl.BlockSpec((1, TH, WCout), lambda b, r: (b, r, 0)),
        ),
        compiler_params=pltpu.CompilerParams(
            dimension_semantics=("parallel", "parallel"),
            vmem_limit_bytes=32 * 1024 * 1024,
        ),
    )(xh, wk, bias_l, gamma_l, gmat, scale_l, shift_l)

    return out.reshape(B, H, W, Cout)


def reference(x_nhwc, w_hwio, bias, gamma, scale, shift):
    y = jax.lax.conv_general_dilated(
        x_nhwc, w_hwio, window_strides=(1, 1), padding=((1, 1), (1, 1)),
        dimension_numbers=('NHWC', 'HWIO', 'NHWC'))
    y = y + bias[None, None, None, :]
    ms = jnp.mean(y * y, axis=-1, keepdims=True)
    y = y * jax.lax.rsqrt(ms + EPS) * gamma[None, None, None, :]
    y = y * (scale[:, None, None, :] + 1.0) + shift[:, None, None, :]
    return y * jax.nn.sigmoid(y)


if __name__ == "__main__":
    key = jax.random.PRNGKey(0)
    k_x, k_w, k_b, k_g, k_sc, k_sh = jax.random.split(key, 6)

    B, Cin, Cout, H, W, KH, KW = 2, 4, 8, 16, 16, 3, 3

    # PyTorch-style NCHW input, converted to NHWC for the kernel.
    x_nchw = jax.random.normal(k_x, (B, Cin, H, W), dtype=jnp.float32)
    x_nhwc = jnp.transpose(x_nchw, (0, 2, 3, 1))

    # Parameters: kaiming_normal_-style conv weight (std = sqrt(2/fan_in)); small nonzero
    # bias / non-unit gamma so the bias-add and gamma paths are actually exercised.
    fan_in = Cin * KH * KW
    w_oihw = jax.random.normal(k_w, (Cout, Cin, KH, KW), dtype=jnp.float32) * jnp.sqrt(2.0 / fan_in)
    w_hwio = jnp.transpose(w_oihw, (2, 3, 1, 0))
    bias = 0.1 * jax.random.normal(k_b, (Cout,), dtype=jnp.float32)
    gamma = 1.0 + 0.1 * jax.random.normal(k_g, (Cout,), dtype=jnp.float32)

    # scale_shift as in diffusion FiLM conditioning: per-(batch, channel)
    scale = 0.1 * jax.random.normal(k_sc, (B, Cout), dtype=jnp.float32)
    shift = 0.1 * jax.random.normal(k_sh, (B, Cout), dtype=jnp.float32)

    out = conv2d_block(x_nhwc, w_hwio, bias, gamma, scale, shift)
    out = jax.block_until_ready(out)

    ref = reference(x_nhwc, w_hwio, bias, gamma, scale, shift)
    assert out.shape == (B, H, W, Cout)
    assert jnp.allclose(out, ref, rtol=1e-3, atol=1e-3), "mismatch vs JAX reference"

    print("KERNEL_OK")
</pallas_src>

<mosaic_0001>
module attributes {stable_mosaic.version = 11 : i64} {
  func.func @conv2d_block_kernel(%arg0: i32, %arg1: i32, %arg2: memref<1x18x64xf32, #tpu.memory_space<vmem>>, %arg3: memref<3x64x128xf32, #tpu.memory_space<vmem>>, %arg4: memref<1x128xf32, #tpu.memory_space<vmem>>, %arg5: memref<1x128xf32, #tpu.memory_space<vmem>>, %arg6: memref<128x128xf32, #tpu.memory_space<vmem>>, %arg7: memref<1x1x128xf32, #tpu.memory_space<vmem>>, %arg8: memref<1x1x128xf32, #tpu.memory_space<vmem>>, %arg9: memref<1x8x128xf32, #tpu.memory_space<vmem>>) attributes {dimension_semantics = [#tpu.dimension_semantics<parallel>, #tpu.dimension_semantics<parallel>], iteration_bounds = array<i64: 2, 2>, scalar_prefetch = 0 : i64, scratch_operands = 0 : i64, tpu.core_type = #tpu.core_type<tc>, window_params = [{transform_indices = @transform_0, window_bounds = array<i64: 1, 18, 64>}, {pipeline_mode = #tpu.pipeline_mode<synchronous>, transform_indices = @transform_1, window_bounds = array<i64: 3, 64, 128>}, {pipeline_mode = #tpu.pipeline_mode<synchronous>, transform_indices = @transform_2, window_bounds = array<i64: 1, 128>}, {pipeline_mode = #tpu.pipeline_mode<synchronous>, transform_indices = @transform_3, window_bounds = array<i64: 1, 128>}, {pipeline_mode = #tpu.pipeline_mode<synchronous>, transform_indices = @transform_4, window_bounds = array<i64: 128, 128>}, {transform_indices = @transform_5, window_bounds = array<i64: 1, 1, 128>}, {transform_indices = @transform_6, window_bounds = array<i64: 1, 1, 128>}, {transform_indices = @transform_7, window_bounds = array<i64: 1, 8, 128>}]} {
    %c8_i32 = arith.constant 8 : i32
    %0 = arith.muli %arg1, %c8_i32 : i32
    %1 = tpu.assume_multiple %0, 8 : i32
    %cst = arith.constant 0.000000e+00 : f32
    %2 = vector.broadcast %cst : f32 to vector<8x128xf32>
    %c0_i32 = arith.constant 0 : i32
    %3 = arith.addi %1, %c0_i32 : i32
    %c0 = arith.constant 0 : index
    %4 = arith.index_cast %3 : i32 to index
    %c0_0 = arith.constant 0 : index
    %5 = vector.load %arg2[%c0, %4, %c0_0] : memref<1x18x64xf32, #tpu.memory_space<vmem>>, vector<1x8x64xf32>
    %6 = vector.shape_cast %5 : vector<1x8x64xf32> to vector<8x64xf32>
    %c0_1 = arith.constant 0 : index
    %c0_2 = arith.constant 0 : index
    %c0_3 = arith.constant 0 : index
    %7 = vector.load %arg3[%c0_1, %c0_2, %c0_3] : memref<3x64x128xf32, #tpu.memory_space<vmem>>, vector<1x64x128xf32>
    %8 = vector.shape_cast %7 : vector<1x64x128xf32> to vector<64x128xf32>
    %cst_4 = arith.constant dense<0.000000e+00> : vector<8x128xf32>
    %9 = tpu.matmul %6, %8, %cst_4 {dimension_numbers = #tpu.dot_dimension_numbers<[1], [0], [0], [1], [0, 0, 1, 1], [], []>} : vector<8x64xf32>, vector<64x128xf32>, vector<8x128xf32> -> vector<8x128xf32>
    %10 = arith.addf %2, %9 : vector<8x128xf32>
    %c1_i32 = arith.constant 1 : i32
    %11 = arith.addi %1, %c1_i32 : i32
    %c0_5 = arith.constant 0 : index
    %12 = arith.index_cast %11 : i32 to index
    %c0_6 = arith.constant 0 : index
    %13 = vector.load %arg2[%c0_5, %12, %c0_6] : memref<1x18x64xf32, #tpu.memory_space<vmem>>, vector<1x8x64xf32>
    %14 = vector.shape_cast %13 : vector<1x8x64xf32> to vector<8x64xf32>
    %c1 = arith.constant 1 : index
    %c0_7 = arith.constant 0 : index
    %c0_8 = arith.constant 0 : index
    %15 = vector.load %arg3[%c1, %c0_7, %c0_8] : memref<3x64x128xf32, #tpu.memory_space<vmem>>, vector<1x64x128xf32>
    %16 = vector.shape_cast %15 : vector<1x64x128xf32> to vector<64x128xf32>
    %cst_9 = arith.constant dense<0.000000e+00> : vector<8x128xf32>
    %17 = tpu.matmul %14, %16, %cst_9 {dimension_numbers = #tpu.dot_dimension_numbers<[1], [0], [0], [1], [0, 0, 1, 1], [], []>} : vector<8x64xf32>, vector<64x128xf32>, vector<8x128xf32> -> vector<8x128xf32>
    %18 = arith.addf %10, %17 : vector<8x128xf32>
    %c2_i32 = arith.constant 2 : i32
    %19 = arith.addi %1, %c2_i32 : i32
    %c0_10 = arith.constant 0 : index
    %20 = arith.index_cast %19 : i32 to index
    %c0_11 = arith.constant 0 : index
    %21 = vector.load %arg2[%c0_10, %20, %c0_11] : memref<1x18x64xf32, #tpu.memory_space<vmem>>, vector<1x8x64xf32>
    %22 = vector.shape_cast %21 : vector<1x8x64xf32> to vector<8x64xf32>
    %c2 = arith.constant 2 : index
    %c0_12 = arith.constant 0 : index
    %c0_13 = arith.constant 0 : index
    %23 = vector.load %arg3[%c2, %c0_12, %c0_13] : memref<3x64x128xf32, #tpu.memory_space<vmem>>, vector<1x64x128xf32>
    %24 = vector.shape_cast %23 : vector<1x64x128xf32> to vector<64x128xf32>
    %cst_14 = arith.constant dense<0.000000e+00> : vector<8x128xf32>
    %25 = tpu.matmul %22, %24, %cst_14 {dimension_numbers = #tpu.dot_dimension_numbers<[1], [0], [0], [1], [0, 0, 1, 1], [], []>} : vector<8x64xf32>, vector<64x128xf32>, vector<8x128xf32> -> vector<8x128xf32>
    %26 = arith.addf %18, %25 : vector<8x128xf32>
    %c0_15 = arith.constant 0 : index
    %c0_16 = arith.constant 0 : index
    %27 = vector.load %arg4[%c0_15, %c0_16] : memref<1x128xf32, #tpu.memory_space<vmem>>, vector<1x128xf32>
    %28 = vector.broadcast %27 : vector<1x128xf32> to vector<8x128xf32>
    %29 = arith.addf %26, %28 : vector<8x128xf32>
    %30 = arith.mulf %29, %29 : vector<8x128xf32>
    %c0_17 = arith.constant 0 : index
    %c0_18 = arith.constant 0 : index
    %31 = vector.load %arg6[%c0_17, %c0_18] : memref<128x128xf32, #tpu.memory_space<vmem>>, vector<128x128xf32>
    %cst_19 = arith.constant dense<0.000000e+00> : vector<8x128xf32>
    %32 = tpu.matmul %30, %31, %cst_19 {dimension_numbers = #tpu.dot_dimension_numbers<[1], [0], [0], [1], [0, 0, 1, 1], [], []>} : vector<8x128xf32>, vector<128x128xf32>, vector<8x128xf32> -> vector<8x128xf32>
    %cst_20 = arith.constant 9.99999997E-7 : f32
    %33 = vector.broadcast %cst_20 : f32 to vector<8x128xf32>
    %34 = arith.addf %32, %33 : vector<8x128xf32>
    %35 = math.rsqrt %34 : vector<8x128xf32>
    %36 = arith.mulf %29, %35 : vector<8x128xf32>
    %c0_21 = arith.constant 0 : index
    %c0_22 = arith.constant 0 : index
    %37 = vector.load %arg5[%c0_21, %c0_22] : memref<1x128xf32, #tpu.memory_space<vmem>>, vector<1x128xf32>
    %38 = vector.broadcast %37 : vector<1x128xf32> to vector<8x128xf32>
    %39 = arith.mulf %36, %38 : vector<8x128xf32>
    %c0_23 = arith.constant 0 : index
    %c0_24 = arith.constant 0 : index
    %c0_25 = arith.constant 0 : index
    %40 = vector.load %arg7[%c0_23, %c0_24, %c0_25] : memref<1x1x128xf32, #tpu.memory_space<vmem>>, vector<1x1x128xf32>
    %41 = vector.shape_cast %40 : vector<1x1x128xf32> to vector<1x128xf32>
    %cst_26 = arith.constant 1.000000e+00 : f32
    %42 = vector.broadcast %cst_26 : f32 to vector<1x128xf32>
    %43 = arith.addf %41, %42 : vector<1x128xf32>
    %44 = vector.broadcast %43 : vector<1x128xf32> to vector<8x128xf32>
    %45 = arith.mulf %39, %44 : vector<8x128xf32>
    %c0_27 = arith.constant 0 : index
    %c0_28 = arith.constant 0 : index
    %c0_29 = arith.constant 0 : index
    %46 = vector.load %arg8[%c0_27, %c0_28, %c0_29] : memref<1x1x128xf32, #tpu.memory_space<vmem>>, vector<1x1x128xf32>
    %47 = vector.shape_cast %46 : vector<1x1x128xf32> to vector<1x128xf32>
    %48 = vector.broadcast %47 : vector<1x128xf32> to vector<8x128xf32>
    %49 = arith.addf %45, %48 : vector<8x128xf32>
    %50 = arith.negf %49 : vector<8x128xf32>
    %51 = math.exp %50 : vector<8x128xf32>
    %cst_30 = arith.constant 1.000000e+00 : f32
    %52 = vector.broadcast %cst_30 : f32 to vector<8x128xf32>
    %53 = arith.addf %52, %51 : vector<8x128xf32>
    %54 = arith.divf %52, %53 : vector<8x128xf32>
    %55 = arith.mulf %49, %54 : vector<8x128xf32>
    %56 = vector.shape_cast %55 : vector<8x128xf32> to vector<1x8x128xf32>
    %c0_31 = arith.constant 0 : index
    %c0_32 = arith.constant 0 : index
    %c0_33 = arith.constant 0 : index
    %57 = vector.load %arg9[%c0_31, %c0_32, %c0_33] : memref<1x8x128xf32, #tpu.memory_space<vmem>>, vector<1x8x128xf32>
    tpu.vector_store %arg9[%c0_31, %c0_32, %c0_33], %56 {strides = array<i32>} : memref<1x8x128xf32, #tpu.memory_space<vmem>>, vector<1x8x128xf32>,
    return
  }
  func.func @transform_0(%arg0: i32, %arg1: i32) -> (i32, i32, i32) {
    %c0_i32 = arith.constant 0 : i32
    %c0_i32_0 = arith.constant 0 : i32
    %c0_i32_1 = arith.constant 0 : i32
    return %arg0, %c0_i32, %c0_i32_0 : i32, i32, i32
  }
  func.func @transform_1(%arg0: i32, %arg1: i32) -> (i32, i32, i32) {
    %c0_i32 = arith.constant 0 : i32
    %c0_i32_0 = arith.constant 0 : i32
    %c0_i32_1 = arith.constant 0 : i32
    %c0_i32_2 = arith.constant 0 : i32
    return %c0_i32, %c0_i32_0, %c0_i32_1 : i32, i32, i32
  }
  func.func @transform_2(%arg0: i32, %arg1: i32) -> (i32, i32) {
    %c0_i32 = arith.constant 0 : i32
    %c0_i32_0 = arith.constant 0 : i32
    %c0_i32_1 = arith.constant 0 : i32
    return %c0_i32, %c0_i32_0 : i32, i32
  }
  func.func @transform_3(%arg0: i32, %arg1: i32) -> (i32, i32) {
    %c0_i32 = arith.constant 0 : i32
    %c0_i32_0 = arith.constant 0 : i32
    %c0_i32_1 = arith.constant 0 : i32
    return %c0_i32, %c0_i32_0 : i32, i32
  }
  func.func @transform_4(%arg0: i32, %arg1: i32) -> (i32, i32) {
    %c0_i32 = arith.constant 0 : i32
    %c0_i32_0 = arith.constant 0 : i32
    %c0_i32_1 = arith.constant 0 : i32
    return %c0_i32, %c0_i32_0 : i32, i32
  }
  func.func @transform_5(%arg0: i32, %arg1: i32) -> (i32, i32, i32) {
    %c0_i32 = arith.constant 0 : i32
    %c0_i32_0 = arith.constant 0 : i32
    %c0_i32_1 = arith.constant 0 : i32
    return %arg0, %c0_i32, %c0_i32_0 : i32, i32, i32
  }
  func.func @transform_6(%arg0: i32, %arg1: i32) -> (i32, i32, i32) {
    %c0_i32 = arith.constant 0 : i32
    %c0_i32_0 = arith.constant 0 : i32
    %c0_i32_1 = arith.constant 0 : i32
    return %arg0, %c0_i32, %c0_i32_0 : i32, i32, i32
  }
  func.func @transform_7(%arg0: i32, %arg1: i32) -> (i32, i32, i32) {
    %c0_i32 = arith.constant 0 : i32
    %c0_i32_0 = arith.constant 0 : i32
    return %arg0, %arg1, %c0_i32 : i32, i32, i32
  }
}

</mosaic_0001>

<llo_original>
// kernel: tpu_custom_call.1
$region0: #{tpu_custom_call.1}
  #allocation0 [shape = 'u32[]', space=smem, size = 0x4, offset = 0x4, fixed_abs, tag = 'smem constant byte address 0x4 - core index']
  #allocation1 [shape = 'u32[144,128]{1,0:T(1,128)}', space=vmem, size = 0x12000, scoped, tag = 'internal scratch']
  %s0 = inlined_call_operand.vmem [shape: f32[2,18,64], index: 0, kind: input, shape index: {}]
  %s1 = inlined_call_operand.hbm [shape: f32[3,64,128], index: 1, kind: input, shape index: {}]
  %s2 = inlined_call_operand.vmem [shape: f32[1,128], index: 2, kind: input, shape index: {}]
  %s3 = inlined_call_operand.vmem [shape: f32[1,128], index: 3, kind: input, shape index: {}]
  %s4 = inlined_call_operand.hbm [shape: f32[128,128], index: 4, kind: input, shape index: {}]
  %s5 = inlined_call_operand.vmem [shape: f32[2,1,128], index: 5, kind: input, shape index: {}]
  %s6 = inlined_call_operand.vmem [shape: f32[2,1,128], index: 6, kind: input, shape index: {}]
  %s7 = inlined_call_operand.hbm [shape: f32[2,16,128], index: 7, kind: output, shape index: {}]
  %s8 = sld [smem:[#allocation0]]
  $region69: #{tpu_custom_call.1} parent=0
    _
  %s10 = ssub.s32 1, %s8
  %s11 = scalar_select 0, %s10, %s8
  $region1: #{tpu_custom_call.1} parent=0
    #allocation2 [shape = 'u8[98304]{0}', space=vmem, size = 0x18000, scoped, tag = 'input window, operand 1, single buffered']
    #allocation3 [shape = 's32[2]{0}', space=sflag, size = 0x8, scoped, tag = 'scoped memory for tpu_custom_call.1']
    #allocation4 [shape = 's32[2]{0}', space=sflag, size = 0x8, scoped, tag = 'scoped memory for tpu_custom_call.1']
    #allocation5 [shape = 'u8[65536]{0}', space=vmem, size = 0x10000, scoped, tag = 'input window, operand 4, single buffered']
    #allocation6 [shape = 's32[1]{0}', space=sflag, size = 0x4, scoped, tag = 'scoped memory for tpu_custom_call.1']
    #allocation7 [shape = 'u8[8192]{0}', space=vmem, size = 0x2000, scoped, tag = 'output window, operand 0']
    %12 = vsyncpa [#allocation3], 0
    %13 = vsyncpa [#allocation6], 0
    %14 = vsyncpa [#allocation4], 0
    %s15 = scalar_lea.sflag [#allocation4], 1
    %16 = vsyncpa %s15, 0
    loop: start=0, step=1, limit=6
    $region2: #{tpu_custom_call.1} parent=1 // loop_pre_header
      _
    $region3: #{tpu_custom_call.1} parent=1 // loop_header
      %s18 = sphi 0, %s22
      %p19 = scmp.ge.s32.totalorder %s18, 6
      %s25 = sphi 0, %s37
      %s26 = sphi 0, %s33
      %s27 = sphi 0, %s25
      %s28 = sphi 0, %s26
      %s29 = sphi 0, %s27
      %s30 = sphi 0, %s28
      %s40 = sphi 0, %s42
      %s43 = sphi 0, %s40
      %s44 = sphi 0, %s43
      %s60 = sphi 0, %s44
      %s64 = sphi 0, %s64
      %s66 = sphi 0, %s64
      %s67 = sphi 0, %s66
      %s81 = sphi 0, %s67
      %s85 = sphi 0, %s85
      %s87 = sphi 0, %s85
      %s88 = sphi 0, %s87
      %s102 = sphi 0, %s88
      %s106 = sphi 0, %s106
      %s108 = sphi 0, %s106
      %s109 = sphi 0, %s108
      %s123 = sphi 0, %s109
      %s127 = sphi 0, %s127
      %s129 = sphi 0, %s127
      %s130 = sphi 0, %s129
      %s144 = sphi 0, %s130
      %s150 = sphi 0, %s152
      %s153 = sphi 0, %s150
      %s154 = sphi 0, %s153
      %s170 = sphi 0, %s154
      %s176 = sphi 0, %s178
      %s179 = sphi 0, %s176
      %s180 = sphi 0, %s179
      %s196 = sphi 0, %s180
      %s204 = sphi 0, %s206
      %s207 = sphi 0, %s204
      %s208 = sphi 0, %s207
      %s224 = sphi 0, %s208
    $region4: #{tpu_custom_call.1} parent=1 // loop_header_branch
      %21 = sbr.rel (%p19) target = $region8
    $region5: #{tpu_custom_call.1} parent=1 // loop_body
      %s23 = ssub.s32 %s18, 1
      %s24 = ssub.s32 %s18, 2
      %s31 = sadd.s32 1, %s26
      %p32 = scmp.ge.s32.totalorder %s31, 2
      %s33 = scalar_select %p32, 0, %s31
      %s34 = sadd.s32 1, %s25
      %s35 = scalar_select %p32, %s34, %s25
      %p36 = scmp.ge.s32.totalorder %s35, 2
      %s37 = scalar_select %p36, 0, %s35
      %s38 = ssub.s32 %s25, %s37
      %p39 = scmp.eq.s32.totalorder %s38, 0
      %s41 = sadd.s32 %s40, 1
      %s42 = scalar_select %p39, %s40, %s41
      %p45 = pneg %p39
      %p46 = scmp.eq.s32.totalorder %s18, 3
      %p47 = por %p45, %p46
      %p48 = scmp.ne.s32.totalorder %s40, %s43
      %p49 = scmp.eq.s32.totalorder %s18, 0
      %p50 = por %p48, %p49
      %p51 = scmp.ne.s32.totalorder %s40, %s43
      %p52 = scmp.eq.s32.totalorder %s23, 3
      %p53 = por %p51, %p52
      %p54 = scmp.ne.s32.totalorder %s43, %s44
      %p55 = scmp.eq.s32.totalorder %s23, 0
      %p56 = por %p54, %p55
      %p57 = scmp.ne.s32.totalorder %s43, %s44
      %p58 = scmp.eq.s32.totalorder %s24, 3
      %p59 = por %p57, %p58
      %p61 = scmp.ne.s32.totalorder %s44, %s60
      %p62 = scmp.eq.s32.totalorder %s24, 0
      %p63 = por %p61, %p62
      %s65 = sadd.s32 %s64, 1
      %p68 = scmp.eq.s32.totalorder %s18, 3
      %p69 = scmp.ne.s32.totalorder %s64, %s66
      %p70 = scmp.eq.s32.totalorder %s18, 0
      %p71 = por %p69, %p70
      %p72 = scmp.ne.s32.totalorder %s64, %s66
      %p73 = scmp.eq.s32.totalorder %s23, 3
      %p74 = por %p72, %p73
      %p75 = scmp.ne.s32.totalorder %s66, %s67
      %p76 = scmp.eq.s32.totalorder %s23, 0
      %p77 = por %p75, %p76
      %p78 = scmp.ne.s32.totalorder %s66, %s67
      %p79 = scmp.eq.s32.totalorder %s24, 3
      %p80 = por %p78, %p79
      %p82 = scmp.ne.s32.totalorder %s67, %s81
      %p83 = scmp.eq.s32.totalorder %s24, 0
      %p84 = por %p82, %p83
      %s86 = sadd.s32 %s85, 1
      %p89 = scmp.eq.s32.totalorder %s18, 3
      %p90 = scmp.ne.s32.totalorder %s85, %s87
      %p91 = scmp.eq.s32.totalorder %s18, 0
      %p92 = por %p90, %p91
      %p93 = scmp.ne.s32.totalorder %s85, %s87
      %p94 = scmp.eq.s32.totalorder %s23, 3
      %p95 = por %p93, %p94
      %p96 = scmp.ne.s32.totalorder %s87, %s88
      %p97 = scmp.eq.s32.totalorder %s23, 0
      %p98 = por %p96, %p97
      %p99 = scmp.ne.s32.totalorder %s87, %s88
      %p100 = scmp.eq.s32.totalorder %s24, 3
      %p101 = por %p99, %p100
      %p103 = scmp.ne.s32.totalorder %s88, %s102
      %p104 = scmp.eq.s32.totalorder %s24, 0
      %p105 = por %p103, %p104
      %s107 = sadd.s32 %s106, 1
      %p110 = scmp.eq.s32.totalorder %s18, 3
      %p111 = scmp.ne.s32.totalorder %s106, %s108
      %p112 = scmp.eq.s32.totalorder %s18, 0
      %p113 = por %p111, %p112
      %p114 = scmp.ne.s32.totalorder %s106, %s108
      %p115 = scmp.eq.s32.totalorder %s23, 3
      %p116 = por %p114, %p115
      %p117 = scmp.ne.s32.totalorder %s108, %s109
      %p118 = scmp.eq.s32.totalorder %s23, 0
      %p119 = por %p117, %p118
      %p120 = scmp.ne.s32.totalorder %s108, %s109
      %p121 = scmp.eq.s32.totalorder %s24, 3
      %p122 = por %p120, %p121
      %p124 = scmp.ne.s32.totalorder %s109, %s123
      %p125 = scmp.eq.s32.totalorder %s24, 0
      %p126 = por %p124, %p125
      %s128 = sadd.s32 %s127, 1
      %p131 = scmp.eq.s32.totalorder %s18, 3
      %p132 = scmp.ne.s32.totalorder %s127, %s129
      %p133 = scmp.eq.s32.totalorder %s18, 0
      %p134 = por %p132, %p133
      %p135 = scmp.ne.s32.totalorder %s127, %s129
      %p136 = scmp.eq.s32.totalorder %s23, 3
      %p137 = por %p135, %p136
      %p138 = scmp.ne.s32.totalorder %s129, %s130
      %p139 = scmp.eq.s32.totalorder %s23, 0
      %p140 = por %p138, %p139
      %p141 = scmp.ne.s32.totalorder %s129, %s130
      %p142 = scmp.eq.s32.totalorder %s24, 3
      %p143 = por %p141, %p142
      %p145 = scmp.ne.s32.totalorder %s130, %s144
      %p146 = scmp.eq.s32.totalorder %s24, 0
      %p147 = por %p145, %p146
      %s148 = ssub.s32 %s25, %s37
      %p149 = scmp.eq.s32.totalorder %s148, 0
      %s151 = sadd.s32 %s150, 1
      %s152 = scalar_select %p149, %s150, %s151
      %p155 = pneg %p149
      %p156 = scmp.eq.s32.totalorder %s18, 3
      %p157 = por %p155, %p156
      %p158 = scmp.ne.s32.totalorder %s150, %s153
      %p159 = scmp.eq.s32.totalorder %s18, 0
      %p160 = por %p158, %p159
      %p161 = scmp.ne.s32.totalorder %s150, %s153
      %p162 = scmp.eq.s32.totalorder %s23, 3
      %p163 = por %p161, %p162
      %p164 = scmp.ne.s32.totalorder %s153, %s154
      %p165 = scmp.eq.s32.totalorder %s23, 0
      %p166 = por %p164, %p165
      %p167 = scmp.ne.s32.totalorder %s153, %s154
      %p168 = scmp.eq.s32.totalorder %s24, 3
      %p169 = por %p167, %p168
      %p171 = scmp.ne.s32.totalorder %s154, %s170
      %p172 = scmp.eq.s32.totalorder %s24, 0
      %p173 = por %p171, %p172
      %s174 = ssub.s32 %s25, %s37
      %p175 = scmp.eq.s32.totalorder %s174, 0
      %s177 = sadd.s32 %s176, 1
      %s178 = scalar_select %p175, %s176, %s177
      %p181 = pneg %p175
      %p182 = scmp.eq.s32.totalorder %s18, 3
      %p183 = por %p181, %p182
      %p184 = scmp.ne.s32.totalorder %s176, %s179
      %p185 = scmp.eq.s32.totalorder %s18, 0
      %p186 = por %p184, %p185
      %p187 = scmp.ne.s32.totalorder %s176, %s179
      %p188 = scmp.eq.s32.totalorder %s23, 3
      %p189 = por %p187, %p188
      %p190 = scmp.ne.s32.totalorder %s179, %s180
      %p191 = scmp.eq.s32.totalorder %s23, 0
      %p192 = por %p190, %p191
      %p193 = scmp.ne.s32.totalorder %s179, %s180
      %p194 = scmp.eq.s32.totalorder %s24, 3
      %p195 = por %p193, %p194
      %p197 = scmp.ne.s32.totalorder %s180, %s196
      %p198 = scmp.eq.s32.totalorder %s24, 0
      %p199 = por %p197, %p198
      %s200 = ssub.s32 %s25, %s37
      %s201 = ssub.s32 %s26, %s33
      %s202 = sor.u32 %s200, %s201
      %p203 = scmp.eq.s32.totalorder %s202, 0
      %s205 = sadd.s32 %s204, 1
      %s206 = scalar_select %p203, %s204, %s205
      %p209 = pneg %p203
      %p210 = scmp.eq.s32.totalorder %s18, 3
      %p211 = por %p209, %p210
      %p212 = scmp.ne.s32.totalorder %s204, %s207
      %p213 = scmp.eq.s32.totalorder %s18, 0
      %p214 = por %p212, %p213
      %p215 = scmp.ne.s32.totalorder %s204, %s207
      %p216 = scmp.eq.s32.totalorder %s23, 3
      %p217 = por %p215, %p216
      %p218 = scmp.ne.s32.totalorder %s207, %s208
      %p219 = scmp.eq.s32.totalorder %s23, 0
      %p220 = por %p218, %p219
      %p221 = scmp.ne.s32.totalorder %s207, %s208
      %p222 = scmp.eq.s32.totalorder %s24, 3
      %p223 = por %p221, %p222
      %p225 = scmp.ne.s32.totalorder %s208, %s224
      %p226 = scmp.eq.s32.totalorder %s24, 0
      %p227 = por %p225, %p226
      %p228 = scmp.le.s32.totalorder 1, %s18
      %p229 = scmp.lt.s32.totalorder %s18, 5
      %p230 = pnand %p228, %p229
      %p231 = pneg %p230
      // Predicated region
      $region9: #{tpu_custom_call.1} parent=5 // pred_check
        _
      $region10: #{tpu_custom_call.1} parent=5 // pred_check_branch
        %233 = sbr.rel (%p230) target = $region12
      $region11: #{tpu_custom_call.1} parent=5 // pred_region
        %s234 = ssub.s32 %s18, 1
        // Predicated region
        $region13: #{tpu_custom_call.1} parent=11 // pred_check
          %p235 = pneg %p77
        $region14: #{tpu_custom_call.1} parent=11 // pred_check_branch
          %237 = sbr.rel (%p235) target = $region16
        $region15: #{tpu_custom_call.1} parent=11 // pred_region
          %s239 = ssub.s32 3072, 3072
          %240 = vsyncadd [#allocation3], %s239
          %s241 = sshll.u32 [#allocation2], 4
          %s242 = int_to_ptr.vmem [resolvable:$true] %s241
          %247 = dma.hbm_to_vmem [thread:$0]  %s1, 3072, %s242, [#allocation3], 128, 128, 8
        $region16: #{tpu_custom_call.1} parent=11 // pred_fallthru
          _
        // Predicated region
        $region17: #{tpu_custom_call.1} parent=11 // pred_check
          %p248 = pneg %p98
        $region18: #{tpu_custom_call.1} parent=11 // pred_check_branch
          %250 = sbr.rel (%p248) target = $region20
        $region19: #{tpu_custom_call.1} parent=11 // pred_region
          _
        $region20: #{tpu_custom_call.1} parent=11 // pred_fallthru
          _
        // Predicated region
        $region21: #{tpu_custom_call.1} parent=11 // pred_check
          %p251 = pneg %p119
        $region22: #{tpu_custom_call.1} parent=11 // pred_check_branch
          %253 = sbr.rel (%p251) target = $region24
        $region23: #{tpu_custom_call.1} parent=11 // pred_region
          _
        $region24: #{tpu_custom_call.1} parent=11 // pred_fallthru
          _
        // Predicated region
        $region25: #{tpu_custom_call.1} parent=11 // pred_check
          %p254 = pneg %p140
        $region26: #{tpu_custom_call.1} parent=11 // pred_check_branch
          %256 = sbr.rel (%p254) target = $region28
        $region27: #{tpu_custom_call.1} parent=11 // pred_region
          %s258 = ssub.s32 2048, 2048
          %259 = vsyncadd [#allocation6], %s258
          %s260 = sshll.u32 [#allocation5], 4
          %s261 = int_to_ptr.vmem [resolvable:$true] %s260
          %266 = dma.hbm_to_vmem [thread:$0]  %s4, 2048, %s261, [#allocation6], 128, 128, 8
        $region28: #{tpu_custom_call.1} parent=11 // pred_fallthru
          _
      $region12: #{tpu_custom_call.1} parent=5 // pred_fallthru
        _
      %p267 = scmp.lt.s32.totalorder %s18, 4
      // Predicated region
      $region29: #{tpu_custom_call.1} parent=5 // pred_check
        %p268 = pneg %p267
      $region30: #{tpu_custom_call.1} parent=5 // pred_check_branch
        %270 = sbr.rel (%p268) target = $region32
      $region31: #{tpu_custom_call.1} parent=5 // pred_region
        // Predicated region
        $region33: #{tpu_custom_call.1} parent=31 // pred_check
          %p271 = pneg %p50
        $region34: #{tpu_custom_call.1} parent=31 // pred_check_branch
          %273 = sbr.rel (%p271) target = $region36
        $region35: #{tpu_custom_call.1} parent=31 // pred_region
          %p274 = scmp.lt.s32.totalorder %s25, 1
          %s275 = scalar_select %p274, %s25, 1
          %s276 = smul.addr %s275, 3
          %s277 = smul.addr %s276, 8
          %s278 = scalar_lea.vmem %s0, %s277
        $region36: #{tpu_custom_call.1} parent=31 // pred_fallthru
          _
        // Predicated region
        $region37: #{tpu_custom_call.1} parent=31 // pred_check
          %p279 = pneg %p160
        $region38: #{tpu_custom_call.1} parent=31 // pred_check_branch
          %281 = sbr.rel (%p279) target = $region40
        $region39: #{tpu_custom_call.1} parent=31 // pred_region
          %p282 = scmp.lt.s32.totalorder %s25, 1
          %s283 = scalar_select %p282, %s25, 1
          %s284 = scalar_lea.vmem %s5, %s283
        $region40: #{tpu_custom_call.1} parent=31 // pred_fallthru
          _
        // Predicated region
        $region41: #{tpu_custom_call.1} parent=31 // pred_check
          %p285 = pneg %p186
        $region42: #{tpu_custom_call.1} parent=31 // pred_check_branch
          %287 = sbr.rel (%p285) target = $region44
        $region43: #{tpu_custom_call.1} parent=31 // pred_region
          %p288 = scmp.lt.s32.totalorder %s25, 1
          %s289 = scalar_select %p288, %s25, 1
          %s290 = scalar_lea.vmem %s6, %s289
        $region44: #{tpu_custom_call.1} parent=31 // pred_fallthru
          _
      $region32: #{tpu_custom_call.1} parent=5 // pred_fallthru
        _
      %p291 = scmp.le.s32.totalorder 1, %s18
      %p292 = scmp.lt.s32.totalorder %s18, 5
      %p293 = pnand %p291, %p292
      %p294 = pneg %p293
      // Predicated region
      $region45: #{tpu_custom_call.1} parent=5 // pred_check
        _
      $region46: #{tpu_custom_call.1} parent=5 // pred_check_branch
        %296 = sbr.rel (%p293) target = $region48
      $region47: #{tpu_custom_call.1} parent=5 // pred_region
        %s297 = ssub.s32 %s18, 1
        // Predicated region
        $region49: #{tpu_custom_call.1} parent=47 // pred_check
          %p298 = pneg %p77
        $region50: #{tpu_custom_call.1} parent=47 // pred_check_branch
          %300 = sbr.rel (%p298) target = $region52
        $region51: #{tpu_custom_call.1} parent=47 // pred_region
          %301 = dma.done [#allocation3], 3072
        $region52: #{tpu_custom_call.1} parent=47 // pred_fallthru
          _
        // Predicated region
        $region53: #{tpu_custom_call.1} parent=47 // pred_check
          %p302 = pneg %p140
        $region54: #{tpu_custom_call.1} parent=47 // pred_check_branch
          %304 = sbr.rel (%p302) target = $region56
        $region55: #{tpu_custom_call.1} parent=47 // pred_region
          %305 = dma.done [#allocation6], 2048
        $region56: #{tpu_custom_call.1} parent=47 // pred_fallthru
          _
        %p306 = scmp.lt.s32.totalorder %s27, 1
        %s307 = scalar_select %p306, %s27, 1
        %s308 = smul.addr %s307, 3
        %s309 = smul.addr %s308, 8
        %s310 = scalar_lea.vmem %s0, %s309
        %p311 = pneg %p56
        %p312 = pneg %p53
        %p313 = pneg %p77
        %p314 = pneg %p74
        %p315 = pneg %p98
        %p316 = pneg %p95
        %p317 = pneg %p119
        %p318 = pneg %p116
        %p319 = pneg %p140
        %p320 = pneg %p137
        %p321 = scmp.lt.s32.totalorder %s27, 1
        %s322 = scalar_select %p321, %s27, 1
        %s323 = scalar_lea.vmem %s5, %s322
        %p324 = pneg %p166
        %p325 = pneg %p163
        %p326 = scmp.lt.s32.totalorder %s27, 1
        %s327 = scalar_select %p326, %s27, 1
        %s328 = scalar_lea.vmem %s6, %s327
        %p329 = pneg %p192
        %p330 = pneg %p189
        %p331 = pneg %p220
        %p332 = pneg %p217
        %s333 = sand.u32 %s207, 1
        %s334 = scalar_lea.sflag [#allocation4], %s333
        %s335 = sand.u32 %s207, 1
        %s336 = smul.addr %s335, 8
        %s337 = scalar_lea.vmem [#allocation7], %s336
        %p338 = scmp.lt.s32.totalorder %s27, 1
        %s339 = scalar_select %p338, %s27, 1
        %s340 = smul.addr %s339, 3
        %s341 = smul.addr %s340, 8
        %s342 = scalar_lea.vmem %s0, %s341
        %p343 = scmp.lt.s32.totalorder %s27, 1
        %s344 = scalar_select %p343, %s27, 1
        %s345 = scalar_lea.vmem %s5, %s344
        %p346 = scmp.lt.s32.totalorder %s27, 1
        %s347 = scalar_select %p346, %s27, 1
        %s348 = scalar_lea.vmem %s6, %s347
        %s349 = smul.u32 %s28, 8
        %s350 = scalar_lea.vmem %s342, %s349
        %v351 = vld [vmem:[%s350] sm:$0xff]
        %v352 = vld [vmem:[#allocation2] sm:$0xff]
        %v353 = vld [vmem:[#allocation2 + $0x8] sm:$0xff]
        %v354 = vld [vmem:[#allocation2 + $0x10] sm:$0xff]
        %v355 = vld [vmem:[#allocation2 + $0x18] sm:$0xff]
        %v356 = vld [vmem:[#allocation2 + $0x20] sm:$0xff]
        %v357 = vld [vmem:[#allocation2 + $0x28] sm:$0xff]
        %v358 = vld [vmem:[#allocation2 + $0x30] sm:$0xff]
        %v359 = vld [vmem:[#allocation2 + $0x38] sm:$0xff]
        %s360 = sadd.s32 %s349, 1
        %s361 = scalar_lea.vmem %s342, %s360
        %v362 = vld [vmem:[%s361] sm:$0xff]
        %s363 = scalar_lea.vmem [#allocation2], 64
        %v364 = vld [vmem:[%s363] sm:$0xff]
        %v365 = vld [vmem:[%s363 + $0x8] sm:$0xff]
        %v366 = vld [vmem:[%s363 + $0x10] sm:$0xff]
        %v367 = vld [vmem:[%s363 + $0x18] sm:$0xff]
        %v368 = vld [vmem:[%s363 + $0x20] sm:$0xff]
        %v369 = vld [vmem:[%s363 + $0x28] sm:$0xff]
        %v370 = vld [vmem:[%s363 + $0x30] sm:$0xff]
        %v371 = vld [vmem:[%s363 + $0x38] sm:$0xff]
        %vm372 = vcmask 523264
        %v374 = vsel %vm372, %v362, 0
        %376 = vmatprep.subr.mxu0 0.0
        %377 = vmatpush1.msra.mxu0 %v364
        %378 = vmatprep.subr.mxu0 0.0
        %379 = vmatpush1.msra.mxu0 %v365
        %380 = vmatprep.subr.mxu0 0.0
        %381 = vmatpush1.msra.mxu0 %v366
        %382 = vmatprep.subr.mxu0 0.0
        %383 = vmatpush1.msra.mxu0 %v367
        %384 = vmatprep.subr.mxu0 0.0
        %385 = vmatpush1.msra.mxu0 %v368
        %386 = vmatprep.subr.mxu0 0.0
        %387 = vmatpush1.msra.mxu0 %v369
        %388 = vmatprep.subr.mxu0 0.0
        %389 = vmatpush1.msra.mxu0 %v370
        %390 = vmatprep.subr.mxu0 0.0
        %391 = vmatpush1.msra.mxu0 %v371
        %392 = vmatprep.subr.mxu0 0.0
        %393 = vmatpush1.msra.mxu0 0.0
        %394 = vmatprep.subr.mxu0 0.0
        %395 = vmatpush1.msra.mxu0 0.0
        %396 = vmatprep.subr.mxu0 0.0
        %397 = vmatpush1.msra.mxu0 0.0
        %398 = vmatprep.subr.mxu0 0.0
        %399 = vmatpush1.msra.mxu0 0.0
        %400 = vmatprep.subr.mxu0 0.0
        %401 = vmatpush1.msra.mxu0 0.0
        %402 = vmatprep.subr.mxu0 0.0
        %403 = vmatpush1.msra.mxu0 0.0
        %404 = vmatprep.subr.mxu0 0.0
        %405 = vmatpush1.msra.mxu0 0.0
        %406 = vmatprep.subr.mxu0 0.0
        %407 = vmatpush1.msra.mxu0 0.0
        %408 = vmatprep.subr.mxu0 0.0
        %409 = vmatpush1.msra.mxu0 0.0
        %410 = vmatprep.subr.mxu0 0.0
        %411 = vmatpush1.msra.mxu0 0.0
        %412 = vmatprep.subr.mxu0 0.0
        %413 = vmatpush1.msra.mxu0 0.0
        %414 = vmatprep.subr.mxu0 0.0
        %415 = vmatpush1.msra.mxu0 0.0
        %416 = vmatprep.subr.mxu0 0.0
        %417 = vmatpush1.msra.mxu0 0.0
        %418 = vmatprep.subr.mxu0 0.0
        %419 = vmatpush1.msra.mxu0 0.0
        %420 = vmatprep.subr.mxu0 0.0
        %421 = vmatpush1.msra.mxu0 0.0
        %422 = vmatprep.subr.mxu0 0.0
        %423 = vmatpush1.msra.mxu0 0.0
        %424 = vmatprep.subr.mxu0 0.0
        %425 = vmatpush1.msra.mxu0 0.0
        %426 = vmatprep.subr.mxu0 0.0
        %427 = vmatpush1.msra.mxu0 0.0
        %428 = vmatprep.subr.mxu0 0.0
        %429 = vmatpush1.msra.mxu0 0.0
        %430 = vmatprep.subr.mxu0 0.0
        %431 = vmatpush1.msra.mxu0 0.0
        %432 = vmatprep.subr.mxu0 0.0
        %433 = vmatpush1.msra.mxu0 0.0
        %434 = vmatprep.subr.mxu0 0.0
        %435 = vmatpush1.msra.mxu0 0.0
        %436 = vmatprep.subr.mxu0 0.0
        %437 = vmatpush1.msra.mxu0 0.0
        %438 = vmatprep.subr.mxu0 0.0
        %439 = vmatpush1.msra.mxu0 0.0
        %440 = vmatprep.mubr.f32.mxu0 0.0
        %441 = vmatmul.mubr.f32.gmra.mrb[0].mxu0 %v374
        %v442 = vpop.f32.mrb[0].mxu0
        %v443 = vadd.f32 0.0, %v442
        %v444 = vpop.f32.mrb[0].mxu0
        %445 = vdwg.mxu0
        %v447 = vsel %vm372, %v351, 0
        %449 = vmatprep.subr.mxu0 0.0
        %450 = vmatpush1.msra.mxu0 %v352
        %451 = vmatprep.subr.mxu0 0.0
        %452 = vmatpush1.msra.mxu0 %v353
        %453 = vmatprep.subr.mxu0 0.0
        %454 = vmatpush1.msra.mxu0 %v354
        %455 = vmatprep.subr.mxu0 0.0
        %456 = vmatpush1.msra.mxu0 %v355
        %457 = vmatprep.subr.mxu0 0.0
        %458 = vmatpush1.msra.mxu0 %v356
        %459 = vmatprep.subr.mxu0 0.0
        %460 = vmatpush1.msra.mxu0 %v357
        %461 = vmatprep.subr.mxu0 0.0
        %462 = vmatpush1.msra.mxu0 %v358
        %463 = vmatprep.subr.mxu0 0.0
        %464 = vmatpush1.msra.mxu0 %v359
        %465 = vmatprep.subr.mxu0 0.0
        %466 = vmatpush1.msra.mxu0 0.0
        %467 = vmatprep.subr.mxu0 0.0
        %468 = vmatpush1.msra.mxu0 0.0
        %469 = vmatprep.subr.mxu0 0.0
        %470 = vmatpush1.msra.mxu0 0.0
        %471 = vmatprep.subr.mxu0 0.0
        %472 = vmatpush1.msra.mxu0 0.0
        %473 = vmatprep.subr.mxu0 0.0
        %474 = vmatpush1.msra.mxu0 0.0
        %475 = vmatprep.subr.mxu0 0.0
        %476 = vmatpush1.msra.mxu0 0.0
        %477 = vmatprep.subr.mxu0 0.0
        %478 = vmatpush1.msra.mxu0 0.0
        %479 = vmatprep.subr.mxu0 0.0
        %480 = vmatpush1.msra.mxu0 0.0
        %481 = vmatprep.subr.mxu0 0.0
        %482 = vmatpush1.msra.mxu0 0.0
        %483 = vmatprep.subr.mxu0 0.0
        %484 = vmatpush1.msra.mxu0 0.0
        %485 = vmatprep.subr.mxu0 0.0
        %486 = vmatpush1.msra.mxu0 0.0
        %487 = vmatprep.subr.mxu0 0.0
        %488 = vmatpush1.msra.mxu0 0.0
        %489 = vmatprep.subr.mxu0 0.0
        %490 = vmatpush1.msra.mxu0 0.0
        %491 = vmatprep.subr.mxu0 0.0
        %492 = vmatpush1.msra.mxu0 0.0
        %493 = vmatprep.subr.mxu0 0.0
        %494 = vmatpush1.msra.mxu0 0.0
        %495 = vmatprep.subr.mxu0 0.0
        %496 = vmatpush1.msra.mxu0 0.0
        %497 = vmatprep.subr.mxu0 0.0
        %498 = vmatpush1.msra.mxu0 0.0
        %499 = vmatprep.subr.mxu0 0.0
        %500 = vmatpush1.msra.mxu0 0.0
        %501 = vmatprep.subr.mxu0 0.0
        %502 = vmatpush1.msra.mxu0 0.0
        %503 = vmatprep.subr.mxu0 0.0
        %504 = vmatpush1.msra.mxu0 0.0
        %505 = vmatprep.subr.mxu0 0.0
        %506 = vmatpush1.msra.mxu0 0.0
        %507 = vmatprep.subr.mxu0 0.0
        %508 = vmatpush1.msra.mxu0 0.0
        %509 = vmatprep.subr.mxu0 0.0
        %510 = vmatpush1.msra.mxu0 0.0
        %511 = vmatprep.subr.mxu0 0.0
        %512 = vmatpush1.msra.mxu0 0.0
        %513 = vmatprep.mubr.f32.mxu0 0.0
        %514 = vmatmul.mubr.f32.gmra.mrb[0].mxu0 %v447
        %v515 = vpop.f32.mrb[0].mxu0
        %v516 = vadd.f32 %v443, %v515
        %v517 = vpop.f32.mrb[0].mxu0
        %518 = vdwg.mxu0
        %s519 = sadd.s32 %s349, 2
        %s520 = scalar_lea.vmem %s342, %s519
        %v521 = vld [vmem:[%s520] sm:$0xff]
        %s522 = scalar_lea.vmem [#allocation2], 128
        %v523 = vld [vmem:[%s522] sm:$0xff]
        %v524 = vld [vmem:[%s522 + $0x8] sm:$0xff]
        %v525 = vld [vmem:[%s522 + $0x10] sm:$0xff]
        %v526 = vld [vmem:[%s522 + $0x18] sm:$0xff]
        %v527 = vld [vmem:[%s522 + $0x20] sm:$0xff]
        %v528 = vld [vmem:[%s522 + $0x28] sm:$0xff]
        %v529 = vld [vmem:[%s522 + $0x30] sm:$0xff]
        %v530 = vld [vmem:[%s522 + $0x38] sm:$0xff]
        %v532 = vsel %vm372, %v521, 0
        %534 = vmatprep.subr.mxu0 0.0
        %535 = vmatpush1.msra.mxu0 %v523
        %536 = vmatprep.subr.mxu0 0.0
        %537 = vmatpush1.msra.mxu0 %v524
        %538 = vmatprep.subr.mxu0 0.0
        %539 = vmatpush1.msra.mxu0 %v525
        %540 = vmatprep.subr.mxu0 0.0
        %541 = vmatpush1.msra.mxu0 %v526
        %542 = vmatprep.subr.mxu0 0.0
        %543 = vmatpush1.msra.mxu0 %v527
        %544 = vmatprep.subr.mxu0 0.0
        %545 = vmatpush1.msra.mxu0 %v528
        %546 = vmatprep.subr.mxu0 0.0
        %547 = vmatpush1.msra.mxu0 %v529
        %548 = vmatprep.subr.mxu0 0.0
        %549 = vmatpush1.msra.mxu0 %v530
        %550 = vmatprep.subr.mxu0 0.0
        %551 = vmatpush1.msra.mxu0 0.0
        %552 = vmatprep.subr.mxu0 0.0
        %553 = vmatpush1.msra.mxu0 0.0
        %554 = vmatprep.subr.mxu0 0.0
        %555 = vmatpush1.msra.mxu0 0.0
        %556 = vmatprep.subr.mxu0 0.0
        %557 = vmatpush1.msra.mxu0 0.0
        %558 = vmatprep.subr.mxu0 0.0
        %559 = vmatpush1.msra.mxu0 0.0
        %560 = vmatprep.subr.mxu0 0.0
        %561 = vmatpush1.msra.mxu0 0.0
        %562 = vmatprep.subr.mxu0 0.0
        %563 = vmatpush1.msra.mxu0 0.0
        %564 = vmatprep.subr.mxu0 0.0
        %565 = vmatpush1.msra.mxu0 0.0
        %566 = vmatprep.subr.mxu0 0.0
        %567 = vmatpush1.msra.mxu0 0.0
        %568 = vmatprep.subr.mxu0 0.0
        %569 = vmatpush1.msra.mxu0 0.0
        %570 = vmatprep.subr.mxu0 0.0
        %571 = vmatpush1.msra.mxu0 0.0
        %572 = vmatprep.subr.mxu0 0.0
        %573 = vmatpush1.msra.mxu0 0.0
        %574 = vmatprep.subr.mxu0 0.0
        %575 = vmatpush1.msra.mxu0 0.0
        %576 = vmatprep.subr.mxu0 0.0
        %577 = vmatpush1.msra.mxu0 0.0
        %578 = vmatprep.subr.mxu0 0.0
        %579 = vmatpush1.msra.mxu0 0.0
        %580 = vmatprep.subr.mxu0 0.0
        %581 = vmatpush1.msra.mxu0 0.0
        %582 = vmatprep.subr.mxu0 0.0
        %583 = vmatpush1.msra.mxu0 0.0
        %584 = vmatprep.subr.mxu0 0.0
        %585 = vmatpush1.msra.mxu0 0.0
        %586 = vmatprep.subr.mxu0 0.0
        %587 = vmatpush1.msra.mxu0 0.0
        %588 = vmatprep.subr.mxu0 0.0
        %589 = vmatpush1.msra.mxu0 0.0
        %590 = vmatprep.subr.mxu0 0.0
        %591 = vmatpush1.msra.mxu0 0.0
        %592 = vmatprep.subr.mxu0 0.0
        %593 = vmatpush1.msra.mxu0 0.0
        %594 = vmatprep.subr.mxu0 0.0
        %595 = vmatpush1.msra.mxu0 0.0
        %596 = vmatprep.subr.mxu0 0.0
        %597 = vmatpush1.msra.mxu0 0.0
        %598 = vmatprep.mubr.f32.mxu0 0.0
        %599 = vmatmul.mubr.f32.gmra.mrb[0].mxu0 %v532
        %v600 = vpop.f32.mrb[0].mxu0
        %v601 = vadd.f32 0.0, %v600
        %v602 = vpop.f32.mrb[0].mxu0
        %603 = vdwg.mxu0
        %v604 = vadd.f32 %v516, %v601
        %v605 = vld [vmem:[%s2] sm:$0x1]
        %v607 = vlaneseq
        %v608 = vshrl.u32 %v607, 7
        %v609 = vsub.s32 0, %v608
        %v610 = vrot.slane %v605, %v609
        %v612 = vadd.f32 %v604, %v610
        %v613 = vmul.f32 %v612, %v612
        %v614 = vld [vmem:[#allocation5] sm:$0xff]
        %v615 = vld [vmem:[#allocation5 + $0x8] sm:$0xff]
        %v616 = vld [vmem:[#allocation5 + $0x10] sm:$0xff]
        %v617 = vld [vmem:[#allocation5 + $0x18] sm:$0xff]
        %v618 = vld [vmem:[#allocation5 + $0x20] sm:$0xff]
        %v619 = vld [vmem:[#allocation5 + $0x28] sm:$0xff]
        %v620 = vld [vmem:[#allocation5 + $0x30] sm:$0xff]
        %v621 = vld [vmem:[#allocation5 + $0x38] sm:$0xff]
        %v622 = vld [vmem:[#allocation5 + $0x40] sm:$0xff]
        %v623 = vld [vmem:[#allocation5 + $0x48] sm:$0xff]
        %v624 = vld [vmem:[#allocation5 + $0x50] sm:$0xff]
        %v625 = vld [vmem:[#allocation5 + $0x58] sm:$0xff]
        %v626 = vld [vmem:[#allocation5 + $0x60] sm:$0xff]
        %v627 = vld [vmem:[#allocation5 + $0x68] sm:$0xff]
        %v628 = vld [vmem:[#allocation5 + $0x70] sm:$0xff]
        %v629 = vld [vmem:[#allocation5 + $0x78] sm:$0xff]
        %630 = vmatprep.subr.mxu0 0.0
        %631 = vmatpush1.msra.mxu0 %v614
        %632 = vmatprep.subr.mxu0 0.0
        %633 = vmatpush1.msra.mxu0 %v615
        %634 = vmatprep.subr.mxu0 0.0
        %635 = vmatpush1.msra.mxu0 %v616
        %636 = vmatprep.subr.mxu0 0.0
        %637 = vmatpush1.msra.mxu0 %v617
        %638 = vmatprep.subr.mxu0 0.0
        %639 = vmatpush1.msra.mxu0 %v618
        %640 = vmatprep.subr.mxu0 0.0
        %641 = vmatpush1.msra.mxu0 %v619
        %642 = vmatprep.subr.mxu0 0.0
        %643 = vmatpush1.msra.mxu0 %v620
        %644 = vmatprep.subr.mxu0 0.0
        %645 = vmatpush1.msra.mxu0 %v621
        %646 = vmatprep.subr.mxu0 0.0
        %647 = vmatpush1.msra.mxu0 %v622
        %648 = vmatprep.subr.mxu0 0.0
        %649 = vmatpush1.msra.mxu0 %v623
        %650 = vmatprep.subr.mxu0 0.0
        %651 = vmatpush1.msra.mxu0 %v624
        %652 = vmatprep.subr.mxu0 0.0
        %653 = vmatpush1.msra.mxu0 %v625
        %654 = vmatprep.subr.mxu0 0.0
        %655 = vmatpush1.msra.mxu0 %v626
        %656 = vmatprep.subr.mxu0 0.0
        %657 = vmatpush1.msra.mxu0 %v627
        %658 = vmatprep.subr.mxu0 0.0
        %659 = vmatpush1.msra.mxu0 %v628
        %660 = vmatprep.subr.mxu0 0.0
        %661 = vmatpush1.msra.mxu0 %v629
        %662 = vmatprep.subr.mxu0 0.0
        %663 = vmatpush1.msra.mxu0 0.0
        %664 = vmatprep.subr.mxu0 0.0
        %665 = vmatpush1.msra.mxu0 0.0
        %666 = vmatprep.subr.mxu0 0.0
        %667 = vmatpush1.msra.mxu0 0.0
        %668 = vmatprep.subr.mxu0 0.0
        %669 = vmatpush1.msra.mxu0 0.0
        %670 = vmatprep.subr.mxu0 0.0
        %671 = vmatpush1.msra.mxu0 0.0
        %672 = vmatprep.subr.mxu0 0.0
        %673 = vmatpush1.msra.mxu0 0.0
        %674 = vmatprep.subr.mxu0 0.0
        %675 = vmatpush1.msra.mxu0 0.0
        %676 = vmatprep.subr.mxu0 0.0
        %677 = vmatpush1.msra.mxu0 0.0
        %678 = vmatprep.subr.mxu0 0.0
        %679 = vmatpush1.msra.mxu0 0.0
        %680 = vmatprep.subr.mxu0 0.0
        %681 = vmatpush1.msra.mxu0 0.0
        %682 = vmatprep.subr.mxu0 0.0
        %683 = vmatpush1.msra.mxu0 0.0
        %684 = vmatprep.subr.mxu0 0.0
        %685 = vmatpush1.msra.mxu0 0.0
        %686 = vmatprep.subr.mxu0 0.0
        %687 = vmatpush1.msra.mxu0 0.0
        %688 = vmatprep.subr.mxu0 0.0
        %689 = vmatpush1.msra.mxu0 0.0
        %690 = vmatprep.subr.mxu0 0.0
        %691 = vmatpush1.msra.mxu0 0.0
        %692 = vmatprep.subr.mxu0 0.0
        %693 = vmatpush1.msra.mxu0 0.0
        %694 = vmatprep.mubr.f32.mxu0 0.0
        %695 = vmatmul.mubr.f32.gmra.mrb[0].mxu0 %v613
        %v696 = vpop.f32.mrb[0].mxu0
        %v697 = vadd.f32 1e-06, %v696
        %v698 = vpop.f32.mrb[0].mxu0
        %699 = vdwg.mxu0
        %v700 = vrsqrt.pop %v697
        %v701 = vmul.f32 %v612, %v700
        %v702 = vld [vmem:[%s3] sm:$0x1]
        %v704 = vlaneseq
        %v705 = vshrl.u32 %v704, 7
        %v706 = vsub.s32 0, %v705
        %v707 = vrot.slane %v702, %v706
        %v709 = vmul.f32 %v701, %v707
        %v710 = vld [vmem:[%s345] sm:$0x1]
        %v711 = vadd.f32 %v710, 1.0
        %v713 = vlaneseq
        %v714 = vshrl.u32 %v713, 7
        %v715 = vsub.s32 0, %v714
        %v716 = vrot.slane %v711, %v715
        %v718 = vmul.f32 %v709, %v716
        %v719 = vld [vmem:[%s348] sm:$0x1]
        %v721 = vlaneseq
        %v722 = vshrl.u32 %v721, 7
        %v723 = vsub.s32 0, %v722
        %v724 = vrot.slane %v719, %v723
        %v726 = vadd.f32 %v718, %v724
        %v727 = vxor.u32 %v726, 2147483648
        %v728 = vmul.f32 %v727, 1.442695
        %v729 = vpow.pop %v728
        %v730 = vadd.f32 %v729, 1.0
        %v731 = vrcp.pop %v730
        %v732 = vmul.f32 1.0, %v731
        %v733 = vmul.f32 %v726, %v732
        %734 = vst [vmem:[%s337] sm:$0xff] %v733
        %s735 = sand.u32 %s207, 1
        %s736 = scalar_lea.sflag [#allocation4], %s735
        %s737 = sand.u32 %s207, 1
        %s738 = smul.addr %s737, 8
        %s739 = scalar_lea.vmem [#allocation7], %s738
        // Predicated region
        $region57: #{tpu_custom_call.1} parent=47 // pred_check
          %p740 = pneg %p217
        $region58: #{tpu_custom_call.1} parent=47 // pred_check_branch
          %742 = sbr.rel (%p740) target = $region60
        $region59: #{tpu_custom_call.1} parent=47 // pred_region
          %s744 = ssub.s32 128, 128
          %745 = vsyncadd %s736, %s744
          %s746 = smul.addr %s27, 2
          %s747 = sadd.s32 %s28, %s746
          %s748 = smul.addr %s747, 128
          %s749 = scalar_lea.hbm %s7, %s748
          %s751 = sshll.u32 %s739, 4
          %s752 = int_to_ptr.vmem [resolvable:$true] %s751
          %754 = dma.vmem_to_hbm [thread:$0]  %s752, 128, %s749, %s736
        $region60: #{tpu_custom_call.1} parent=47 // pred_fallthru
          _
      $region48: #{tpu_custom_call.1} parent=5 // pred_fallthru
        _
      %p755 = scmp.le.s32.totalorder 2, %s18
      // Predicated region
      $region61: #{tpu_custom_call.1} parent=5 // pred_check
        %p756 = pneg %p755
      $region62: #{tpu_custom_call.1} parent=5 // pred_check_branch
        %758 = sbr.rel (%p756) target = $region64
      $region63: #{tpu_custom_call.1} parent=5 // pred_region
        %s759 = ssub.s32 %s18, 2
        // Predicated region
        $region65: #{tpu_custom_call.1} parent=63 // pred_check
          %p760 = pneg %p223
        $region66: #{tpu_custom_call.1} parent=63 // pred_check_branch
          %762 = sbr.rel (%p760) target = $region68
        $region67: #{tpu_custom_call.1} parent=63 // pred_region
          %s763 = sand.u32 %s208, 1
          %s764 = scalar_lea.sflag [#allocation4], %s763
          %s765 = sand.u32 %s208, 1
          %s766 = smul.addr %s765, 8
          %s767 = scalar_lea.vmem [#allocation7], %s766
          %768 = dma.done %s764, 128
        $region68: #{tpu_custom_call.1} parent=63 // pred_fallthru
          _
      $region64: #{tpu_custom_call.1} parent=5 // pred_fallthru
        _
    $region6: #{tpu_custom_call.1} parent=1 // loop_footer
      %s22 = sadd.s32 1, %s18
    $region7: #{tpu_custom_call.1} parent=1 // loop_footer_branch
      %17 = sbr.rel target = $region3
    $region8: #{tpu_custom_call.1} parent=1 // loop_exit
      _
    %769 = vsyncpa [#allocation3], 1
    %s770 = scalar_lea.sflag [#allocation3], 1
    %771 = vsyncpa %s770, 1
    %772 = vsyncpa [#allocation6], 1
    %773 = vsyncpa [#allocation4], 1
    %s774 = scalar_lea.sflag [#allocation4], 1
    %775 = vsyncpa %s774, 1

</llo_original>
